<compile_context>
chip_gen: v6e
topology: v6e:2x2x1
jax: 0.10.0
libtpu: 0.0.40
codegen_flags: <defaults>
</compile_context>

<pallas_src>
import math

import jax
import jax.numpy as jnp
from jax.experimental import pallas as pl
from jax.experimental.pallas import tpu as pltpu


def make_pe_table(dim: int, max_len: int = 5000) -> jnp.ndarray:
    """Deterministic buffer identical to the PyTorch __init__ (shape (max_len, dim))."""
    position = jnp.arange(max_len, dtype=jnp.float32)[:, None]            # (max_len, 1)
    div_term = jnp.exp(
        jnp.arange(0, dim, 2, dtype=jnp.float32) * (-math.log(10000.0) / dim)
    )                                                                     # (dim//2,)
    angles = position * div_term                                          # (max_len, dim//2)
    pe = jnp.zeros((max_len, dim), dtype=jnp.float32)
    pe = pe.at[:, 0::2].set(jnp.sin(angles))
    pe = pe.at[:, 1::2].set(jnp.cos(angles))
    return pe


def _add_pe_kernel(x_ref, pe_ref, o_ref):
    # x_ref:  (TB, S, D) tile of activations.
    # pe_ref: (TB, 1, D) matching rows of the pe table; broadcasts over the
    #         seq (sublane) axis for free on the VPU.
    o_ref[...] = (x_ref[...] + pe_ref[...]).astype(o_ref.dtype)


def positional_encoding_forward(
    x: jnp.ndarray,
    pe_table: jnp.ndarray,
    *,
    x_tile_bytes: int = 2 * 1024 * 1024,   # target per-buffer tile size (past the ~85%-of-roofline knee)
) -> jnp.ndarray:
    """y = x + pe[:x.shape[1]] with PyTorch broadcasting (requires B == S here)."""
    B, S, D = x.shape
    assert B == S, (
        "PyTorch broadcast of pe[:seq] (seq,1,dim) vs x (batch,seq,dim) needs batch == seq"
    )

    # pe rows aligned with the batch axis, pre-cast to the activation dtype.
    pe_b = pe_table[:S].astype(x.dtype)[:, None, :]   # (B, 1, D)

    itemsize = jnp.dtype(x.dtype).itemsize

    # Batch rows per grid step: big enough that each x/out tile is a few MiB,
    # small enough that 2x(x) + 2x(out) + 2x(pe) double-buffered tiles stay well
    # under the scoped VMEM limit on all of v5e/v6e/v7x, and capped so the grid
    # keeps >= 2 parallel steps for v7x's two TensorCores.
    tb = max(1, x_tile_bytes // (S * D * itemsize))
    if B >= 2:
        tb = min(tb, pl.cdiv(B, 2))
    tb = min(tb, B)

    grid = (pl.cdiv(B, tb),)

    cost = pl.CostEstimate(
        flops=B * S * D,
        transcendentals=0,
        bytes_accessed=2 * B * S * D * itemsize + B * D * itemsize,
    )

    return pl.pallas_call(
        _add_pe_kernel,
        out_shape=jax.ShapeDtypeStruct((B, S, D), x.dtype),
        grid=grid,
        in_specs=[
            pl.BlockSpec((tb, S, D), lambda i: (i, 0, 0)),
            pl.BlockSpec((tb, 1, D), lambda i: (i, 0, 0)),
        ],
        out_specs=pl.BlockSpec((tb, S, D), lambda i: (i, 0, 0)),
        compiler_params=pltpu.CompilerParams(
            dimension_semantics=("parallel",),
            vmem_limit_bytes=32 * 1024 * 1024,
        ),
        cost_estimate=cost,
    )(x, pe_b)


if __name__ == "__main__":
    # B == S so the module's pe[:seq] broadcast is well-defined; D is a multiple
    # of 128 so loads/stores are lane-dense (unmasked vst).
    B, S, D = 8, 8, 128
    key = jax.random.PRNGKey(0)
    x = jax.random.normal(key, (B, S, D), dtype=jnp.float32)

    pe_table = make_pe_table(D, max_len=5000)

    y = positional_encoding_forward(x, pe_table)
    y = jax.block_until_ready(y)

    # Reference in plain JAX (mirrors torch: x + pe[:x.size(1)] with pe (max_len,1,dim))
    y_ref = x + pe_table[:S][:, None, :]
    assert y.shape == x.shape
    assert jnp.allclose(y, y_ref, atol=1e-6), "mismatch vs reference"

    print("KERNEL_OK")
</pallas_src>

<mosaic_0001>
module attributes {stable_mosaic.version = 11 : i64} {
  func.func @_add_pe_kernel(%arg0: i32, %arg1: memref<4x8x128xf32, #tpu.memory_space<vmem>>, %arg2: memref<4x1x128xf32, #tpu.memory_space<vmem>>, %arg3: memref<4x8x128xf32, #tpu.memory_space<vmem>>) attributes {dimension_semantics = [#tpu.dimension_semantics<parallel>], iteration_bounds = array<i64: 2>, scalar_prefetch = 0 : i64, scratch_operands = 0 : i64, tpu.core_type = #tpu.core_type<tc>, window_params = [{transform_indices = @transform_0, window_bounds = array<i64: 4, 8, 128>}, {transform_indices = @transform_1, window_bounds = array<i64: 4, 1, 128>}, {transform_indices = @transform_2, window_bounds = array<i64: 4, 8, 128>}]} {
    %c0 = arith.constant 0 : index
    %c0_0 = arith.constant 0 : index
    %c0_1 = arith.constant 0 : index
    %0 = vector.load %arg1[%c0, %c0_0, %c0_1] : memref<4x8x128xf32, #tpu.memory_space<vmem>>, vector<4x8x128xf32>
    %c0_2 = arith.constant 0 : index
    %c0_3 = arith.constant 0 : index
    %c0_4 = arith.constant 0 : index
    %1 = vector.load %arg2[%c0_2, %c0_3, %c0_4] : memref<4x1x128xf32, #tpu.memory_space<vmem>>, vector<4x1x128xf32>
    %2 = vector.broadcast %1 : vector<4x1x128xf32> to vector<4x8x128xf32>
    %3 = arith.addf %0, %2 : vector<4x8x128xf32>
    %c0_5 = arith.constant 0 : index
    %c0_6 = arith.constant 0 : index
    %c0_7 = arith.constant 0 : index
    %4 = vector.load %arg3[%c0_5, %c0_6, %c0_7] : memref<4x8x128xf32, #tpu.memory_space<vmem>>, vector<4x8x128xf32>
    tpu.vector_store %arg3[%c0_5, %c0_6, %c0_7], %3 {strides = array<i32>} : memref<4x8x128xf32, #tpu.memory_space<vmem>>, vector<4x8x128xf32>,
    return
  }
  func.func @transform_0(%arg0: i32) -> (i32, i32, i32) {
    %c0_i32 = arith.constant 0 : i32
    %c0_i32_0 = arith.constant 0 : i32
    %c0_i32_1 = arith.constant 0 : i32
    return %arg0, %c0_i32, %c0_i32_0 : i32, i32, i32
  }
  func.func @transform_1(%arg0: i32) -> (i32, i32, i32) {
    %c0_i32 = arith.constant 0 : i32
    %c0_i32_0 = arith.constant 0 : i32
    %c0_i32_1 = arith.constant 0 : i32
    return %arg0, %c0_i32, %c0_i32_0 : i32, i32, i32
  }
  func.func @transform_2(%arg0: i32) -> (i32, i32, i32) {
    %c0_i32 = arith.constant 0 : i32
    %c0_i32_0 = arith.constant 0 : i32
    %c0_i32_1 = arith.constant 0 : i32
    return %arg0, %c0_i32, %c0_i32_0 : i32, i32, i32
  }
}

</mosaic_0001>

<llo_original>
// kernel: tpu_custom_call.1
$region0: #{tpu_custom_call.1}
  #allocation0 [shape = 'u32[]', space=smem, size = 0x4, offset = 0x4, fixed_abs, tag = 'smem constant byte address 0x4 - core index']
  #allocation1 [shape = 'u32[144,128]{1,0:T(1,128)}', space=vmem, size = 0x12000, scoped, tag = 'internal scratch']
  %s0 = inlined_call_operand.hbm [shape: f32[8,8,128], index: 0, kind: input, shape index: {}]
  %s1 = inlined_call_operand.hbm [shape: f32[8,1,128], index: 1, kind: input, shape index: {}]
  %s2 = inlined_call_operand.hbm [shape: f32[8,8,128], index: 2, kind: output, shape index: {}]
  %s3 = sld [smem:[#allocation0]]
  $region49: #{tpu_custom_call.1} parent=0
    _
  %s5 = ssub.s32 1, %s3
  %s6 = scalar_select 0, %s5, %s3
  $region1: #{tpu_custom_call.1} parent=0
    #allocation2 [shape = 'u8[32768]{0}', space=vmem, size = 0x8000, scoped, tag = 'input window, operand 0']
    #allocation3 [shape = 's32[2]{0}', space=sflag, size = 0x8, scoped, tag = 'scoped memory for tpu_custom_call.1']
    #allocation4 [shape = 's32[2]{0}', space=sflag, size = 0x8, scoped, tag = 'scoped memory for tpu_custom_call.1']
    #allocation5 [shape = 'u8[4096]{0}', space=vmem, size = 0x1000, scoped, tag = 'input window, operand 1']
    #allocation6 [shape = 's32[2]{0}', space=sflag, size = 0x8, scoped, tag = 'scoped memory for tpu_custom_call.1']
    #allocation7 [shape = 'u8[32768]{0}', space=vmem, size = 0x8000, scoped, tag = 'output window, operand 0']
    %7 = vsyncpa [#allocation3], 0
    %s8 = scalar_lea.sflag [#allocation3], 1
    %9 = vsyncpa %s8, 0
    %10 = vsyncpa [#allocation6], 0
    %s11 = scalar_lea.sflag [#allocation6], 1
    %12 = vsyncpa %s11, 0
    %13 = vsyncpa [#allocation4], 0
    %s14 = scalar_lea.sflag [#allocation4], 1
    %15 = vsyncpa %s14, 0
    loop: start=0, step=1, limit=4
    $region2: #{tpu_custom_call.1} parent=1 // loop_pre_header
      _
    $region3: #{tpu_custom_call.1} parent=1 // loop_header
      %s17 = sphi 0, %s21
      %p18 = scmp.ge.s32.totalorder %s17, 4
      %s27 = sphi 0, %s29
      %s30 = sphi 0, %s27
      %s31 = sphi 0, %s30
      %s47 = sphi 0, %s31
      %s53 = sphi 0, %s55
      %s56 = sphi 0, %s53
      %s57 = sphi 0, %s56
      %s73 = sphi 0, %s57
      %s79 = sphi 0, %s81
      %s82 = sphi 0, %s79
      %s83 = sphi 0, %s82
      %s99 = sphi 0, %s83
    $region4: #{tpu_custom_call.1} parent=1 // loop_header_branch
      %20 = sbr.rel (%p18) target = $region8
    $region5: #{tpu_custom_call.1} parent=1 // loop_body
      %s22 = ssub.s32 %s17, 1
      %s23 = ssub.s32 %s17, 2
      %s24 = sadd.s32 %s17, 1
      %s25 = ssub.s32 %s17, %s24
      %p26 = scmp.eq.s32.totalorder %s25, 0
      %s28 = sadd.s32 %s27, 1
      %s29 = scalar_select %p26, %s27, %s28
      %p32 = pneg %p26
      %p33 = scmp.eq.s32.totalorder %s17, 1
      %p34 = por %p32, %p33
      %p35 = scmp.ne.s32.totalorder %s27, %s30
      %p36 = scmp.eq.s32.totalorder %s17, 0
      %p37 = por %p35, %p36
      %p38 = scmp.ne.s32.totalorder %s27, %s30
      %p39 = scmp.eq.s32.totalorder %s22, 1
      %p40 = por %p38, %p39
      %p41 = scmp.ne.s32.totalorder %s30, %s31
      %p42 = scmp.eq.s32.totalorder %s22, 0
      %p43 = por %p41, %p42
      %p44 = scmp.ne.s32.totalorder %s30, %s31
      %p45 = scmp.eq.s32.totalorder %s23, 1
      %p46 = por %p44, %p45
      %p48 = scmp.ne.s32.totalorder %s31, %s47
      %p49 = scmp.eq.s32.totalorder %s23, 0
      %p50 = por %p48, %p49
      %s51 = ssub.s32 %s17, %s24
      %p52 = scmp.eq.s32.totalorder %s51, 0
      %s54 = sadd.s32 %s53, 1
      %s55 = scalar_select %p52, %s53, %s54
      %p58 = pneg %p52
      %p59 = scmp.eq.s32.totalorder %s17, 1
      %p60 = por %p58, %p59
      %p61 = scmp.ne.s32.totalorder %s53, %s56
      %p62 = scmp.eq.s32.totalorder %s17, 0
      %p63 = por %p61, %p62
      %p64 = scmp.ne.s32.totalorder %s53, %s56
      %p65 = scmp.eq.s32.totalorder %s22, 1
      %p66 = por %p64, %p65
      %p67 = scmp.ne.s32.totalorder %s56, %s57
      %p68 = scmp.eq.s32.totalorder %s22, 0
      %p69 = por %p67, %p68
      %p70 = scmp.ne.s32.totalorder %s56, %s57
      %p71 = scmp.eq.s32.totalorder %s23, 1
      %p72 = por %p70, %p71
      %p74 = scmp.ne.s32.totalorder %s57, %s73
      %p75 = scmp.eq.s32.totalorder %s23, 0
      %p76 = por %p74, %p75
      %s77 = ssub.s32 %s17, %s24
      %p78 = scmp.eq.s32.totalorder %s77, 0
      %s80 = sadd.s32 %s79, 1
      %s81 = scalar_select %p78, %s79, %s80
      %p84 = pneg %p78
      %p85 = scmp.eq.s32.totalorder %s17, 1
      %p86 = por %p84, %p85
      %p87 = scmp.ne.s32.totalorder %s79, %s82
      %p88 = scmp.eq.s32.totalorder %s17, 0
      %p89 = por %p87, %p88
      %p90 = scmp.ne.s32.totalorder %s79, %s82
      %p91 = scmp.eq.s32.totalorder %s22, 1
      %p92 = por %p90, %p91
      %p93 = scmp.ne.s32.totalorder %s82, %s83
      %p94 = scmp.eq.s32.totalorder %s22, 0
      %p95 = por %p93, %p94
      %p96 = scmp.ne.s32.totalorder %s82, %s83
      %p97 = scmp.eq.s32.totalorder %s23, 1
      %p98 = por %p96, %p97
      %p100 = scmp.ne.s32.totalorder %s83, %s99
      %p101 = scmp.eq.s32.totalorder %s23, 0
      %p102 = por %p100, %p101
      %p103 = scmp.le.s32.totalorder 1, %s17
      %p104 = scmp.lt.s32.totalorder %s17, 3
      %p105 = pnand %p103, %p104
      %p106 = pneg %p105
      // Predicated region
      $region9: #{tpu_custom_call.1} parent=5 // pred_check
        _
      $region10: #{tpu_custom_call.1} parent=5 // pred_check_branch
        %108 = sbr.rel (%p105) target = $region12
      $region11: #{tpu_custom_call.1} parent=5 // pred_region
        %s109 = ssub.s32 %s17, 1
      $region12: #{tpu_custom_call.1} parent=5 // pred_fallthru
        _
      %p110 = scmp.lt.s32.totalorder %s17, 2
      // Predicated region
      $region13: #{tpu_custom_call.1} parent=5 // pred_check
        %p111 = pneg %p110
      $region14: #{tpu_custom_call.1} parent=5 // pred_check_branch
        %113 = sbr.rel (%p111) target = $region16
      $region15: #{tpu_custom_call.1} parent=5 // pred_region
        // Predicated region
        $region17: #{tpu_custom_call.1} parent=15 // pred_check
          %p114 = pneg %p37
        $region18: #{tpu_custom_call.1} parent=15 // pred_check_branch
          %116 = sbr.rel (%p114) target = $region20
        $region19: #{tpu_custom_call.1} parent=15 // pred_region
          %s117 = sand.u32 %s27, 1
          %s118 = scalar_lea.sflag [#allocation3], %s117
          %s119 = sand.u32 %s27, 1
          %s120 = smul.addr %s119, 32
          %s121 = scalar_lea.vmem [#allocation2], %s120
          %s122 = smul.u32 4, %s17
          %s124 = ssub.s32 512, 512
          %125 = vsyncadd %s118, %s124
          %s126 = smul.addr %s122, 128
          %s127 = scalar_lea.hbm %s0, %s126
          %s128 = sshll.u32 %s121, 4
          %s129 = int_to_ptr.vmem [resolvable:$true] %s128
          %134 = dma.hbm_to_vmem [thread:$0]  %s127, 512, %s129, %s118, 128, 128, 8
        $region20: #{tpu_custom_call.1} parent=15 // pred_fallthru
          _
        // Predicated region
        $region21: #{tpu_custom_call.1} parent=15 // pred_check
          %p135 = pneg %p63
        $region22: #{tpu_custom_call.1} parent=15 // pred_check_branch
          %137 = sbr.rel (%p135) target = $region24
        $region23: #{tpu_custom_call.1} parent=15 // pred_region
          %s138 = sand.u32 %s53, 1
          %s139 = scalar_lea.sflag [#allocation6], %s138
          %s140 = sand.u32 %s53, 1
          %s141 = smul.addr %s140, 4
          %s142 = scalar_lea.vmem [#allocation5], %s141
          %s143 = smul.u32 4, %s17
          %s145 = ssub.s32 64, 64
          %146 = vsyncadd %s139, %s145
          %s147 = smul.addr %s143, 16
          %s148 = scalar_lea.hbm %s1, %s147
          %s149 = sshll.u32 %s142, 4
          %s150 = int_to_ptr.vmem [resolvable:$true] %s149
          %155 = dma.hbm_to_vmem [thread:$0]  %s148, 64, %s150, %s139, 16, 16, 1
        $region24: #{tpu_custom_call.1} parent=15 // pred_fallthru
          _
      $region16: #{tpu_custom_call.1} parent=5 // pred_fallthru
        _
      %p156 = scmp.le.s32.totalorder 1, %s17
      %p157 = scmp.lt.s32.totalorder %s17, 3
      %p158 = pnand %p156, %p157
      %p159 = pneg %p158
      // Predicated region
      $region25: #{tpu_custom_call.1} parent=5 // pred_check
        _
      $region26: #{tpu_custom_call.1} parent=5 // pred_check_branch
        %161 = sbr.rel (%p158) target = $region28
      $region27: #{tpu_custom_call.1} parent=5 // pred_region
        %s162 = ssub.s32 %s17, 1
        %s163 = sand.u32 %s30, 1
        %s164 = scalar_lea.sflag [#allocation3], %s163
        %s165 = sand.u32 %s30, 1
        %s166 = smul.addr %s165, 32
        %s167 = scalar_lea.vmem [#allocation2], %s166
        // Predicated region
        $region29: #{tpu_custom_call.1} parent=27 // pred_check
          %p168 = pneg %p43
        $region30: #{tpu_custom_call.1} parent=27 // pred_check_branch
          %170 = sbr.rel (%p168) target = $region32
        $region31: #{tpu_custom_call.1} parent=27 // pred_region
          %171 = dma.done %s164, 512
        $region32: #{tpu_custom_call.1} parent=27 // pred_fallthru
          _
        %s172 = sand.u32 %s56, 1
        %s173 = scalar_lea.sflag [#allocation6], %s172
        %s174 = sand.u32 %s56, 1
        %s175 = smul.addr %s174, 4
        %s176 = scalar_lea.vmem [#allocation5], %s175
        // Predicated region
        $region33: #{tpu_custom_call.1} parent=27 // pred_check
          %p177 = pneg %p69
        $region34: #{tpu_custom_call.1} parent=27 // pred_check_branch
          %179 = sbr.rel (%p177) target = $region36
        $region35: #{tpu_custom_call.1} parent=27 // pred_region
          %180 = dma.done %s173, 64
        $region36: #{tpu_custom_call.1} parent=27 // pred_fallthru
          _
        %s181 = sand.u32 %s30, 1
        %s182 = scalar_lea.sflag [#allocation3], %s181
        %s183 = sand.u32 %s30, 1
        %s184 = smul.addr %s183, 32
        %s185 = scalar_lea.vmem [#allocation2], %s184
        %p186 = pneg %p43
        %p187 = pneg %p40
        %s188 = sand.u32 %s56, 1
        %s189 = scalar_lea.sflag [#allocation6], %s188
        %s190 = sand.u32 %s56, 1
        %s191 = smul.addr %s190, 4
        %s192 = scalar_lea.vmem [#allocation5], %s191
        %p193 = pneg %p69
        %p194 = pneg %p66
        %p195 = pneg %p95
        %p196 = pneg %p92
        %s197 = sand.u32 %s82, 1
        %s198 = scalar_lea.sflag [#allocation4], %s197
        %s199 = sand.u32 %s82, 1
        %s200 = smul.addr %s199, 32
        %s201 = scalar_lea.vmem [#allocation7], %s200
        %s202 = smul.u32 4, %s22
        %s203 = smul.u32 4, %s22
        %s204 = smul.u32 4, %s22
        %v205 = vld [vmem:[%s167] sm:$0xff]
        %v206 = vld [vmem:[%s167 + $0x8] sm:$0xff]
        %v207 = vld [vmem:[%s167 + $0x10] sm:$0xff]
        %v208 = vld [vmem:[%s167 + $0x18] sm:$0xff]
        %v209 = vld [vmem:[%s176] sm:$0x1]
        %v210 = vld [vmem:[%s176 + $0x1] sm:$0x1]
        %v211 = vld [vmem:[%s176 + $0x2] sm:$0x1]
        %v212 = vld [vmem:[%s176 + $0x3] sm:$0x1]
        %v217 = vlaneseq
        %v218 = vshrl.u32 %v217, 7
        %v219 = vsub.s32 0, %v218
        %v220 = vrot.slane %v209, %v219
        %v221 = vlaneseq
        %v222 = vshrl.u32 %v221, 7
        %v223 = vsub.s32 0, %v222
        %v224 = vrot.slane %v210, %v223
        %v225 = vlaneseq
        %v226 = vshrl.u32 %v225, 7
        %v227 = vsub.s32 0, %v226
        %v228 = vrot.slane %v211, %v227
        %v229 = vlaneseq
        %v230 = vshrl.u32 %v229, 7
        %v231 = vsub.s32 0, %v230
        %v232 = vrot.slane %v212, %v231
        %v237 = vadd.f32 %v205, %v220
        %v238 = vadd.f32 %v206, %v224
        %v239 = vadd.f32 %v207, %v228
        %v240 = vadd.f32 %v208, %v232
        %241 = vst [vmem:[%s201] sm:$0xff] %v237
        %242 = vst [vmem:[%s201 + $0x8] sm:$0xff] %v238
        %243 = vst [vmem:[%s201 + $0x10] sm:$0xff] %v239
        %244 = vst [vmem:[%s201 + $0x18] sm:$0xff] %v240
        %s245 = sand.u32 %s82, 1
        %s246 = scalar_lea.sflag [#allocation4], %s245
        %s247 = sand.u32 %s82, 1
        %s248 = smul.addr %s247, 32
        %s249 = scalar_lea.vmem [#allocation7], %s248
        // Predicated region
        $region37: #{tpu_custom_call.1} parent=27 // pred_check
          %p250 = pneg %p92
        $region38: #{tpu_custom_call.1} parent=27 // pred_check_branch
          %252 = sbr.rel (%p250) target = $region40
        $region39: #{tpu_custom_call.1} parent=27 // pred_region
          %s253 = smul.u32 4, %s22
          %s255 = ssub.s32 512, 512
          %256 = vsyncadd %s246, %s255
          %s257 = smul.addr %s253, 128
          %s258 = scalar_lea.hbm %s2, %s257
          %s259 = sshll.u32 %s249, 4
          %s260 = int_to_ptr.vmem [resolvable:$true] %s259
          %265 = dma.vmem_to_hbm [thread:$0]  %s260, 512, %s258, %s246, 128, 128, 8
        $region40: #{tpu_custom_call.1} parent=27 // pred_fallthru
          _
      $region28: #{tpu_custom_call.1} parent=5 // pred_fallthru
        _
      %p266 = scmp.le.s32.totalorder 2, %s17
      // Predicated region
      $region41: #{tpu_custom_call.1} parent=5 // pred_check
        %p267 = pneg %p266
      $region42: #{tpu_custom_call.1} parent=5 // pred_check_branch
        %269 = sbr.rel (%p267) target = $region44
      $region43: #{tpu_custom_call.1} parent=5 // pred_region
        %s270 = ssub.s32 %s17, 2
        // Predicated region
        $region45: #{tpu_custom_call.1} parent=43 // pred_check
          %p271 = pneg %p98
        $region46: #{tpu_custom_call.1} parent=43 // pred_check_branch
          %273 = sbr.rel (%p271) target = $region48
        $region47: #{tpu_custom_call.1} parent=43 // pred_region
          %s274 = sand.u32 %s83, 1
          %s275 = scalar_lea.sflag [#allocation4], %s274
          %s276 = sand.u32 %s83, 1
          %s277 = smul.addr %s276, 32
          %s278 = scalar_lea.vmem [#allocation7], %s277
          %279 = dma.done %s275, 512
        $region48: #{tpu_custom_call.1} parent=43 // pred_fallthru
          _
      $region44: #{tpu_custom_call.1} parent=5 // pred_fallthru
        _
    $region6: #{tpu_custom_call.1} parent=1 // loop_footer
      %s21 = sadd.s32 1, %s17
    $region7: #{tpu_custom_call.1} parent=1 // loop_footer_branch
      %16 = sbr.rel target = $region3
    $region8: #{tpu_custom_call.1} parent=1 // loop_exit
      _
    %280 = vsyncpa [#allocation3], 1
    %s281 = scalar_lea.sflag [#allocation3], 1
    %282 = vsyncpa %s281, 1
    %283 = vsyncpa [#allocation6], 1
    %s284 = scalar_lea.sflag [#allocation6], 1
    %285 = vsyncpa %s284, 1
    %286 = vsyncpa [#allocation4], 1
    %s287 = scalar_lea.sflag [#allocation4], 1
    %288 = vsyncpa %s287, 1

</llo_original>
